<compile_context>
chip_gen: v7x
topology: tpu7x:2x2x1
jax: 0.10.0
libtpu: 0.0.40
codegen_flags: <defaults>
</compile_context>

<pallas_src>
import jax
import jax.numpy as jnp
from jax.experimental import pallas as pl
from jax.experimental.pallas import tpu as pltpu

# Problem sizes (small, layout-friendly: feature dims are multiples of 128).
B = 8             # batch for the small demo case
INPUT_DIM = 256   # AutoEncoder inputDim
HIDDEN_DIM = 128  # AutoEncoder hiddenDim


def _round_up(x, m):
    return ((x + m - 1) // m) * m


def ae_kernel(x_ref, we_ref, wd_ref, b_ref, o_ref):
    """Fused encoder(Linear+ReLU) + decoder(Linear) on one batch tile."""
    hidden_dim = we_ref.shape[1]

    # Encoder: bf16 matmul operands, f32 accumulation; bias-add + ReLU in f32.
    x = x_ref[...].astype(jnp.bfloat16)               # (tm, inputDim) bf16
    h = jnp.dot(x, we_ref[...],
                preferred_element_type=jnp.float32)    # (tm, hiddenDim) f32
    h = jnp.maximum(h + b_ref[:, :hidden_dim], 0.0)

    # Decoder: bf16 matmul operands, f32 accumulation; bias-add in f32.
    y = jnp.dot(h.astype(jnp.bfloat16), wd_ref[...],
                preferred_element_type=jnp.float32)    # (tm, inputDim) f32
    o_ref[...] = (y + b_ref[:, hidden_dim:]).astype(o_ref.dtype)


def _make_call(tm, b_pad, d_in, hidden, x_dtype, out_dtype, grid,
               single_buffer_weights):
    """Builds the pallas_call; `single_buffer_weights` toggles Buffered(1) on the
    VMEM-resident weight/bias specs."""
    resident_kwargs = (
        dict(pipeline_mode=pl.Buffered(1)) if single_buffer_weights else {}
    )
    in_specs = [
        pl.BlockSpec((tm, d_in), lambda i: (i, 0)),                          # x tile (pipelined)
        pl.BlockSpec((d_in, hidden), lambda i: (0, 0), **resident_kwargs),   # encoder W (resident)
        pl.BlockSpec((hidden, d_in), lambda i: (0, 0), **resident_kwargs),   # decoder W (resident)
        pl.BlockSpec((1, hidden + d_in), lambda i: (0, 0), **resident_kwargs),  # packed biases
    ]
    out_specs = pl.BlockSpec((tm, d_in), lambda i: (i, 0))

    flops = 2 * b_pad * (d_in * hidden + hidden * d_in)
    bytes_accessed = (
        b_pad * d_in * (jnp.dtype(x_dtype).itemsize + jnp.dtype(out_dtype).itemsize)
        + 2 * d_in * hidden * 2          # bf16 weights
        + (hidden + d_in) * 4            # f32 packed biases
    )

    return pl.pallas_call(
        ae_kernel,
        out_shape=jax.ShapeDtypeStruct((b_pad, d_in), out_dtype),
        grid_spec=pltpu.PrefetchScalarGridSpec(
            num_scalar_prefetch=0,
            grid=grid,
            in_specs=in_specs,
            out_specs=out_specs,
        ),
        compiler_params=pltpu.CompilerParams(
            dimension_semantics=("parallel",),
        ),
        cost_estimate=pl.CostEstimate(
            flops=flops, transcendentals=0, bytes_accessed=bytes_accessed),
    )


def autoencoder_forward(x, w_enc_bf16, w_dec_bf16, biases, *,
                        block_m=1024, out_dtype=None):
    """x: (B, inputDim) f32 or bf16. w_enc: (inputDim, hiddenDim) bf16.
    w_dec: (hiddenDim, inputDim) bf16. biases: (1, hiddenDim + inputDim) f32."""
    b, d_in = x.shape
    hidden = w_enc_bf16.shape[1]
    out_dtype = x.dtype if out_dtype is None else out_dtype

    # Batch tiling:
    #  - b < 16: one padded tile (sublane multiple of 8); overhead-bound anyway.
    #  - b >= 16: at least 2 grid steps so the "parallel" axis can shard across both
    #    v7x TensorCores, capped at block_m (default 1024 keeps double-buffered f32
    #    x/out tiles ~4 MB, within default scoped VMEM on v5e/v6e/v7x).
    if b < 16:
        tm = _round_up(b, 8)
    else:
        tm = min(block_m, _round_up((b + 1) // 2, 8))
    b_pad = _round_up(b, tm)
    if b_pad != b:
        x = jnp.pad(x, ((0, b_pad - b), (0, 0)))
    grid = (b_pad // tm,)

    try:
        call = _make_call(tm, b_pad, d_in, hidden, x.dtype, out_dtype, grid,
                          single_buffer_weights=True)
        out = call(x, w_enc_bf16, w_dec_bf16, biases)
    except Exception:
        # Fallback if this jax build rejects pipeline_mode=pl.Buffered(1).
        call = _make_call(tm, b_pad, d_in, hidden, x.dtype, out_dtype, grid,
                          single_buffer_weights=False)
        out = call(x, w_enc_bf16, w_dec_bf16, biases)

    return out[:b]


def _linear_params(key, fan_in, fan_out):
    # torch.nn.Linear default init: U(-1/sqrt(fan_in), +1/sqrt(fan_in)).
    kw, kb = jax.random.split(key)
    bound = 1.0 / jnp.sqrt(jnp.float32(fan_in))
    w = jax.random.uniform(kw, (fan_in, fan_out), jnp.float32, -bound, bound)
    b = jax.random.uniform(kb, (1, fan_out), jnp.float32, -bound, bound)
    return w, b


def _reference(x, w_enc_bf16, w_dec_bf16, b_enc, b_dec):
    # Same precision recipe as the kernel (bf16 operands, f32 accumulation/epilogue).
    h = jnp.dot(x.astype(jnp.bfloat16), w_enc_bf16,
                preferred_element_type=jnp.float32) + b_enc
    h = jnp.maximum(h, 0.0)
    y = jnp.dot(h.astype(jnp.bfloat16), w_dec_bf16,
                preferred_element_type=jnp.float32) + b_dec
    return y


if __name__ == "__main__":
    key = jax.random.PRNGKey(0)
    kx, ke, kd, kx2 = jax.random.split(key, 4)

    w_enc, b_enc = _linear_params(ke, INPUT_DIM, HIDDEN_DIM)   # encoder
    w_dec, b_dec = _linear_params(kd, HIDDEN_DIM, INPUT_DIM)   # decoder

    # Weights travel as bf16 (halves weight DMA bytes); biases coalesced into one array.
    w_enc_bf16 = w_enc.astype(jnp.bfloat16)
    w_dec_bf16 = w_dec.astype(jnp.bfloat16)
    biases = jnp.concatenate([b_enc, b_dec], axis=1)           # (1, HIDDEN_DIM + INPUT_DIM)

    # Case 1: small f32 batch (matches the module's typical call).
    x = jax.random.normal(kx, (B, INPUT_DIM), jnp.float32)
    out = jax.block_until_ready(
        autoencoder_forward(x, w_enc_bf16, w_dec_bf16, biases))
    ref = _reference(x, w_enc_bf16, w_dec_bf16, b_enc, b_dec)
    assert out.shape == (B, INPUT_DIM), out.shape
    assert out.dtype == jnp.float32, out.dtype
    assert jnp.allclose(out, ref, atol=1e-2, rtol=1e-2), \
        float(jnp.max(jnp.abs(out - ref)))

    # Case 2: larger bf16 batch — exercises bf16 I/O and the >=2-step parallel grid.
    x2 = jax.random.normal(kx2, (64, INPUT_DIM), jnp.float32).astype(jnp.bfloat16)
    out2 = jax.block_until_ready(
        autoencoder_forward(x2, w_enc_bf16, w_dec_bf16, biases))
    ref2 = _reference(x2, w_enc_bf16, w_dec_bf16, b_enc, b_dec)
    assert out2.shape == (64, INPUT_DIM), out2.shape
    assert out2.dtype == jnp.bfloat16, out2.dtype
    assert jnp.allclose(out2.astype(jnp.float32), ref2, atol=5e-2, rtol=5e-2), \
        float(jnp.max(jnp.abs(out2.astype(jnp.float32) - ref2)))

    print("KERNEL_OK")
</pallas_src>

<mosaic_0001>
module attributes {stable_mosaic.version = 11 : i64} {
  func.func @ae_kernel(%arg0: i32, %arg1: memref<8x256xf32, #tpu.memory_space<vmem>>, %arg2: memref<256x128xbf16, #tpu.memory_space<vmem>>, %arg3: memref<128x256xbf16, #tpu.memory_space<vmem>>, %arg4: memref<1x384xf32, #tpu.memory_space<vmem>>, %arg5: memref<8x256xf32, #tpu.memory_space<vmem>>) attributes {dimension_semantics = [#tpu.dimension_semantics<parallel>], iteration_bounds = array<i64: 1>, scalar_prefetch = 0 : i64, scratch_operands = 0 : i64, tpu.core_type = #tpu.core_type<tc>, window_params = [{transform_indices = @transform_0, window_bounds = array<i64: 8, 256>}, {pipeline_mode = #tpu.pipeline_mode<synchronous>, transform_indices = @transform_1, window_bounds = array<i64: 256, 128>}, {pipeline_mode = #tpu.pipeline_mode<synchronous>, transform_indices = @transform_2, window_bounds = array<i64: 128, 256>}, {pipeline_mode = #tpu.pipeline_mode<synchronous>, transform_indices = @transform_3, window_bounds = array<i64: 1, 384>}, {transform_indices = @transform_4, window_bounds = array<i64: 8, 256>}]} {
    %c0 = arith.constant 0 : index
    %c0_0 = arith.constant 0 : index
    %0 = vector.load %arg1[%c0, %c0_0] : memref<8x256xf32, #tpu.memory_space<vmem>>, vector<8x256xf32>
    %1 = arith.truncf %0 : vector<8x256xf32> to vector<8x256xbf16>
    %c0_1 = arith.constant 0 : index
    %c0_2 = arith.constant 0 : index
    %2 = vector.load %arg2[%c0_1, %c0_2] : memref<256x128xbf16, #tpu.memory_space<vmem>>, vector<256x128xbf16>
    %cst = arith.constant dense<0.000000e+00> : vector<8x128xf32>
    %3 = tpu.matmul %1, %2, %cst {dimension_numbers = #tpu.dot_dimension_numbers<[1], [0], [0], [1], [0, 0, 1, 1], [], []>} : vector<8x256xbf16>, vector<256x128xbf16>, vector<8x128xf32> -> vector<8x128xf32>
    %c0_3 = arith.constant 0 : index
    %c0_4 = arith.constant 0 : index
    %4 = vector.load %arg4[%c0_3, %c0_4] : memref<1x384xf32, #tpu.memory_space<vmem>>, vector<1x128xf32>
    %5 = vector.broadcast %4 : vector<1x128xf32> to vector<8x128xf32>
    %6 = arith.addf %3, %5 : vector<8x128xf32>
    %cst_5 = arith.constant 0.000000e+00 : f32
    %7 = vector.broadcast %cst_5 : f32 to vector<8x128xf32>
    %8 = arith.maximumf %6, %7 : vector<8x128xf32>
    %9 = arith.truncf %8 : vector<8x128xf32> to vector<8x128xbf16>
    %c0_6 = arith.constant 0 : index
    %c0_7 = arith.constant 0 : index
    %10 = vector.load %arg3[%c0_6, %c0_7] : memref<128x256xbf16, #tpu.memory_space<vmem>>, vector<128x256xbf16>
    %cst_8 = arith.constant dense<0.000000e+00> : vector<8x256xf32>
    %11 = tpu.matmul %9, %10, %cst_8 {dimension_numbers = #tpu.dot_dimension_numbers<[1], [0], [0], [1], [0, 0, 1, 1], [], []>} : vector<8x128xbf16>, vector<128x256xbf16>, vector<8x256xf32> -> vector<8x256xf32>
    %c0_9 = arith.constant 0 : index
    %c128 = arith.constant 128 : index
    %12 = vector.load %arg4[%c0_9, %c128] : memref<1x384xf32, #tpu.memory_space<vmem>>, vector<1x256xf32>
    %13 = vector.broadcast %12 : vector<1x256xf32> to vector<8x256xf32>
    %14 = arith.addf %11, %13 : vector<8x256xf32>
    %c0_10 = arith.constant 0 : index
    %c0_11 = arith.constant 0 : index
    %15 = vector.load %arg5[%c0_10, %c0_11] : memref<8x256xf32, #tpu.memory_space<vmem>>, vector<8x256xf32>
    tpu.vector_store %arg5[%c0_10, %c0_11], %14 {strides = array<i32>} : memref<8x256xf32, #tpu.memory_space<vmem>>, vector<8x256xf32>,
    return
  }
  func.func @transform_0(%arg0: i32) -> (i32, i32) {
    %c0_i32 = arith.constant 0 : i32
    %c0_i32_0 = arith.constant 0 : i32
    return %arg0, %c0_i32 : i32, i32
  }
  func.func @transform_1(%arg0: i32) -> (i32, i32) {
    %c0_i32 = arith.constant 0 : i32
    %c0_i32_0 = arith.constant 0 : i32
    %c0_i32_1 = arith.constant 0 : i32
    return %c0_i32, %c0_i32_0 : i32, i32
  }
  func.func @transform_2(%arg0: i32) -> (i32, i32) {
    %c0_i32 = arith.constant 0 : i32
    %c0_i32_0 = arith.constant 0 : i32
    %c0_i32_1 = arith.constant 0 : i32
    return %c0_i32, %c0_i32_0 : i32, i32
  }
  func.func @transform_3(%arg0: i32) -> (i32, i32) {
    %c0_i32 = arith.constant 0 : i32
    %c0_i32_0 = arith.constant 0 : i32
    %c0_i32_1 = arith.constant 0 : i32
    return %c0_i32, %c0_i32_0 : i32, i32
  }
  func.func @transform_4(%arg0: i32) -> (i32, i32) {
    %c0_i32 = arith.constant 0 : i32
    %c0_i32_0 = arith.constant 0 : i32
    return %arg0, %c0_i32 : i32, i32
  }
}

module attributes {stable_mosaic.version = 11 : i64} {
  func.func @ae_kernel(%arg0: i32, %arg1: memref<8x256xf32, #tpu.memory_space<vmem>>, %arg2: memref<256x128xbf16, #tpu.memory_space<vmem>>, %arg3: memref<128x256xbf16, #tpu.memory_space<vmem>>, %arg4: memref<1x384xf32, #tpu.memory_space<vmem>>, %arg5: memref<8x256xf32, #tpu.memory_space<vmem>>) attributes {dimension_semantics = [#tpu.dimension_semantics<parallel>], iteration_bounds = array<i64: 1>, scalar_prefetch = 0 : i64, scratch_operands = 0 : i64, tpu.core_type = #tpu.core_type<tc>, window_params = [{transform_indices = @transform_0, window_bounds = array<i64: 8, 256>}, {pipeline_mode = #tpu.pipeline_mode<synchronous>, transform_indices = @transform_1, window_bounds = array<i64: 256, 128>}, {pipeline_mode = #tpu.pipeline_mode<synchronous>, transform_indices = @transform_2, window_bounds = array<i64: 128, 256>}, {pipeline_mode = #tpu.pipeline_mode<synchronous>, transform_indices = @transform_3, window_bounds = array<i64: 1, 384>}, {transform_indices = @transform_4, window_bounds = array<i64: 8, 256>}]} {
    %c0 = arith.constant 0 : index
    %c0_0 = arith.constant 0 : index
    %0 = vector.load %arg1[%c0, %c0_0] : memref<8x256xf32, #tpu.memory_space<vmem>>, vector<8x256xf32>
    %1 = arith.truncf %0 : vector<8x256xf32> to vector<8x256xbf16>
    %c0_1 = arith.constant 0 : index
    %c0_2 = arith.constant 0 : index
    %2 = vector.load %arg2[%c0_1, %c0_2] : memref<256x128xbf16, #tpu.memory_space<vmem>>, vector<256x128xbf16>
    %cst = arith.constant dense<0.000000e+00> : vector<8x128xf32>
    %3 = tpu.matmul %1, %2, %cst {dimension_numbers = #tpu.dot_dimension_numbers<[1], [0], [0], [1], [0, 0, 1, 1], [], []>} : vector<8x256xbf16>, vector<256x128xbf16>, vector<8x128xf32> -> vector<8x128xf32>
    %c0_3 = arith.constant 0 : index
    %c0_4 = arith.constant 0 : index
    %4 = vector.load %arg4[%c0_3, %c0_4] : memref<1x384xf32, #tpu.memory_space<vmem>>, vector<1x128xf32>
    %5 = vector.broadcast %4 : vector<1x128xf32> to vector<8x128xf32>
    %6 = arith.addf %3, %5 : vector<8x128xf32>
    %cst_5 = arith.constant 0.000000e+00 : f32
    %7 = vector.broadcast %cst_5 : f32 to vector<8x128xf32>
    %8 = arith.maximumf %6, %7 : vector<8x128xf32>
    %9 = arith.truncf %8 : vector<8x128xf32> to vector<8x128xbf16>
    %c0_6 = arith.constant 0 : index
    %c0_7 = arith.constant 0 : index
    %10 = vector.load %arg3[%c0_6, %c0_7] : memref<128x256xbf16, #tpu.memory_space<vmem>>, vector<128x256xbf16>
    %cst_8 = arith.constant dense<0.000000e+00> : vector<8x256xf32>
    %11 = tpu.matmul %9, %10, %cst_8 {dimension_numbers = #tpu.dot_dimension_numbers<[1], [0], [0], [1], [0, 0, 1, 1], [], []>} : vector<8x128xbf16>, vector<128x256xbf16>, vector<8x256xf32> -> vector<8x256xf32>
    %c0_9 = arith.constant 0 : index
    %c128 = arith.constant 128 : index
    %12 = vector.load %arg4[%c0_9, %c128] : memref<1x384xf32, #tpu.memory_space<vmem>>, vector<1x256xf32>
    %13 = vector.broadcast %12 : vector<1x256xf32> to vector<8x256xf32>
    %14 = arith.addf %11, %13 : vector<8x256xf32>
    %c0_10 = arith.constant 0 : index
    %c0_11 = arith.constant 0 : index
    %15 = vector.load %arg5[%c0_10, %c0_11] : memref<8x256xf32, #tpu.memory_space<vmem>>, vector<8x256xf32>
    tpu.vector_store %arg5[%c0_10, %c0_11], %14 {strides = array<i32>} : memref<8x256xf32, #tpu.memory_space<vmem>>, vector<8x256xf32>,
    return
  }
  func.func @transform_0(%arg0: i32) -> (i32, i32) {
    %c0_i32 = arith.constant 0 : i32
    %c0_i32_0 = arith.constant 0 : i32
    return %arg0, %c0_i32 : i32, i32
  }
  func.func @transform_1(%arg0: i32) -> (i32, i32) {
    %c0_i32 = arith.constant 0 : i32
    %c0_i32_0 = arith.constant 0 : i32
    %c0_i32_1 = arith.constant 0 : i32
    return %c0_i32, %c0_i32_0 : i32, i32
  }
  func.func @transform_2(%arg0: i32) -> (i32, i32) {
    %c0_i32 = arith.constant 0 : i32
    %c0_i32_0 = arith.constant 0 : i32
    %c0_i32_1 = arith.constant 0 : i32
    return %c0_i32, %c0_i32_0 : i32, i32
  }
  func.func @transform_3(%arg0: i32) -> (i32, i32) {
    %c0_i32 = arith.constant 0 : i32
    %c0_i32_0 = arith.constant 0 : i32
    %c0_i32_1 = arith.constant 0 : i32
    return %c0_i32, %c0_i32_0 : i32, i32
  }
  func.func @transform_4(%arg0: i32) -> (i32, i32) {
    %c0_i32 = arith.constant 0 : i32
    %c0_i32_0 = arith.constant 0 : i32
    return %arg0, %c0_i32 : i32, i32
  }
}

</mosaic_0001>

<llo_original>
// kernel: tpu_custom_call.1
$region0: #{tpu_custom_call.1}
  #allocation0 [shape = 'u32[]', space=smem, size = 0x4, offset = 0x4, fixed_abs, tag = 'smem constant byte address 0x4 - core index']
  #allocation1 [shape = 'u32[144,128]{1,0:T(1,128)}', space=vmem, size = 0x12000, scoped, tag = 'internal scratch']
  %s0 = inlined_call_operand.hbm [shape: f32[8,256], index: 0, kind: input, shape index: {}]
  %s1 = inlined_call_operand.hbm [shape: bf16[256,128], index: 1, kind: input, shape index: {}]
  %s2 = inlined_call_operand.hbm [shape: bf16[128,256], index: 2, kind: input, shape index: {}]
  %s3 = inlined_call_operand.vmem [shape: f32[1,384], index: 3, kind: input, shape index: {}]
  %s4 = inlined_call_operand.hbm [shape: f32[8,256], index: 4, kind: output, shape index: {}]
  %s5 = sld [smem:[#allocation0]]
  $region38: #{tpu_custom_call.1} parent=0
    _
  %s7 = ssub.s32 1, %s5
  %s8 = scalar_select 0, %s7, %s5
  $region1: #{tpu_custom_call.1} parent=0
    #allocation2 [shape = 'u8[8192]{0}', space=vmem, size = 0x2000, scoped, tag = 'input window, operand 0, single buffered']
    #allocation3 [shape = 's32[1]{0}', space=sflag, size = 0x4, scoped, tag = 'scoped memory for tpu_custom_call.1']
    #allocation4 [shape = 's32[1]{0}', space=sflag, size = 0x4, scoped, tag = 'scoped memory for tpu_custom_call.1']
    #allocation5 [shape = 'u8[65536]{0}', space=vmem, size = 0x10000, scoped, tag = 'input window, operand 1, single buffered']
    #allocation6 [shape = 's32[1]{0}', space=sflag, size = 0x4, scoped, tag = 'scoped memory for tpu_custom_call.1']
    #allocation7 [shape = 'u8[65536]{0}', space=vmem, size = 0x10000, scoped, tag = 'input window, operand 2, single buffered']
    #allocation8 [shape = 'u8[8192]{0}', space=vmem, size = 0x2000, scoped, tag = 'output window, operand 0, single buffered']
    %9 = vsyncpa [#allocation3], 0
    %10 = vsyncpa [#allocation6], 0
    %11 = vsyncpa [#allocation4], 0
    // Predicated region
    $region2: #{tpu_custom_call.1} parent=1 // pred_check
      _
    $region3: #{tpu_custom_call.1} parent=1 // pred_check_branch
      %13 = sbr.rel (0) target = $region5
    $region4: #{tpu_custom_call.1} parent=1 // pred_region
      %s15 = ssub.s32 256, 256
      %16 = vsyncadd [#allocation3], %s15
      %s18 = sshll.u32 [#allocation2], 4
      %s19 = int_to_ptr.vmem [resolvable:$true] %s18
      %21 = dma.hbm_to_vmem [thread:$0]  %s0, 256, %s19, [#allocation3]
    $region5: #{tpu_custom_call.1} parent=1 // pred_fallthru
      _
    // Predicated region
    $region6: #{tpu_custom_call.1} parent=1 // pred_check
      _
    $region7: #{tpu_custom_call.1} parent=1 // pred_check_branch
      %23 = sbr.rel (0) target = $region9
    $region8: #{tpu_custom_call.1} parent=1 // pred_region
      %s25 = ssub.s32 2048, 2048
      %26 = vsyncadd [#allocation6], %s25
      %s27 = sshll.u32 [#allocation5], 4
      %s28 = int_to_ptr.vmem [resolvable:$true] %s27
      %33 = dma.hbm_to_vmem [thread:$0]  %s1, 2048, %s28, [#allocation6], 64, 64, 4
    $region9: #{tpu_custom_call.1} parent=1 // pred_fallthru
      _
    // Predicated region
    $region10: #{tpu_custom_call.1} parent=1 // pred_check
      _
    $region11: #{tpu_custom_call.1} parent=1 // pred_check_branch
      %35 = sbr.rel (0) target = $region13
    $region12: #{tpu_custom_call.1} parent=1 // pred_region
      %s37 = ssub.s32 2048, 2048
      %38 = vsyncadd [#allocation6], %s37
      %s39 = sshll.u32 [#allocation7], 4
      %s40 = int_to_ptr.vmem [resolvable:$true] %s39
      %45 = dma.hbm_to_vmem [thread:$0]  %s2, 2048, %s40, [#allocation6], 128, 128, 8
    $region13: #{tpu_custom_call.1} parent=1 // pred_fallthru
      _
    // Predicated region
    $region14: #{tpu_custom_call.1} parent=1 // pred_check
      _
    $region15: #{tpu_custom_call.1} parent=1 // pred_check_branch
      %47 = sbr.rel (0) target = $region17
    $region16: #{tpu_custom_call.1} parent=1 // pred_region
      _
    $region17: #{tpu_custom_call.1} parent=1 // pred_fallthru
      _
    // Predicated region
    $region18: #{tpu_custom_call.1} parent=1 // pred_check
      _
    $region19: #{tpu_custom_call.1} parent=1 // pred_check_branch
      %49 = sbr.rel (0) target = $region21
    $region20: #{tpu_custom_call.1} parent=1 // pred_region
      %50 = dma.done [#allocation3], 256
    $region21: #{tpu_custom_call.1} parent=1 // pred_fallthru
      _
    // Predicated region
    $region22: #{tpu_custom_call.1} parent=1 // pred_check
      _
    $region23: #{tpu_custom_call.1} parent=1 // pred_check_branch
      %52 = sbr.rel (0) target = $region25
    $region24: #{tpu_custom_call.1} parent=1 // pred_region
      %53 = dma.done [#allocation6], 2048
    $region25: #{tpu_custom_call.1} parent=1 // pred_fallthru
      _
    // Predicated region
    $region26: #{tpu_custom_call.1} parent=1 // pred_check
      _
    $region27: #{tpu_custom_call.1} parent=1 // pred_check_branch
      %55 = sbr.rel (0) target = $region29
    $region28: #{tpu_custom_call.1} parent=1 // pred_region
      %56 = dma.done [#allocation6], 2048
    $region29: #{tpu_custom_call.1} parent=1 // pred_fallthru
      _
    %v58 = vld [vmem:[#allocation2] sm:$0xff]
    %v59 = vld [vmem:[#allocation2 + $0x8] sm:$0xff]
    %v60 = vpack.c.bf16 %v58, %v58
    %v61 = vpack.c.bf16 %v59, %v59
    %v62 = vld [vmem:[#allocation5] sm:$0xf]
    %v63 = vld [vmem:[#allocation5 + $0x4] sm:$0xf]
    %v64 = vld [vmem:[#allocation5 + $0x8] sm:$0xf]
    %v65 = vld [vmem:[#allocation5 + $0xc] sm:$0xf]
    %v66 = vld [vmem:[#allocation5 + $0x10] sm:$0xf]
    %v67 = vld [vmem:[#allocation5 + $0x14] sm:$0xf]
    %v68 = vld [vmem:[#allocation5 + $0x18] sm:$0xf]
    %v69 = vld [vmem:[#allocation5 + $0x1c] sm:$0xf]
    %v70 = vld [vmem:[#allocation5 + $0x20] sm:$0xf]
    %v71 = vld [vmem:[#allocation5 + $0x24] sm:$0xf]
    %v72 = vld [vmem:[#allocation5 + $0x28] sm:$0xf]
    %v73 = vld [vmem:[#allocation5 + $0x2c] sm:$0xf]
    %v74 = vld [vmem:[#allocation5 + $0x30] sm:$0xf]
    %v75 = vld [vmem:[#allocation5 + $0x34] sm:$0xf]
    %v76 = vld [vmem:[#allocation5 + $0x38] sm:$0xf]
    %v77 = vld [vmem:[#allocation5 + $0x3c] sm:$0xf]
    %v78 = vld [vmem:[#allocation5 + $0x40] sm:$0xf]
    %v79 = vld [vmem:[#allocation5 + $0x44] sm:$0xf]
    %v80 = vld [vmem:[#allocation5 + $0x48] sm:$0xf]
    %v81 = vld [vmem:[#allocation5 + $0x4c] sm:$0xf]
    %v82 = vld [vmem:[#allocation5 + $0x50] sm:$0xf]
    %v83 = vld [vmem:[#allocation5 + $0x54] sm:$0xf]
    %v84 = vld [vmem:[#allocation5 + $0x58] sm:$0xf]
    %v85 = vld [vmem:[#allocation5 + $0x5c] sm:$0xf]
    %v86 = vld [vmem:[#allocation5 + $0x60] sm:$0xf]
    %v87 = vld [vmem:[#allocation5 + $0x64] sm:$0xf]
    %v88 = vld [vmem:[#allocation5 + $0x68] sm:$0xf]
    %v89 = vld [vmem:[#allocation5 + $0x6c] sm:$0xf]
    %v90 = vld [vmem:[#allocation5 + $0x70] sm:$0xf]
    %v91 = vld [vmem:[#allocation5 + $0x74] sm:$0xf]
    %v92 = vld [vmem:[#allocation5 + $0x78] sm:$0xf]
    %v93 = vld [vmem:[#allocation5 + $0x7c] sm:$0xf]
    %v94 = vld [vmem:[%s3] sm:$0x1]
    %v96 = vlaneseq
    %v97 = vshrl.u32 %v96, 7
    %v98 = vsub.s32 0, %v97
    %v99 = vrot.slane %v94, %v98
    %v133 = vunpack.c.l.b16 %v62
    %v134 = vunpack.c.l.b16 %v63
    %v135 = vunpack.c.l.b16 %v64
    %v136 = vunpack.c.l.b16 %v65
    %v137 = vunpack.c.l.b16 %v66
    %v138 = vunpack.c.l.b16 %v67
    %v139 = vunpack.c.l.b16 %v68
    %v140 = vunpack.c.l.b16 %v69
    %v141 = vunpack.c.l.b16 %v70
    %v142 = vunpack.c.l.b16 %v71
    %v143 = vunpack.c.l.b16 %v72
    %v144 = vunpack.c.l.b16 %v73
    %v145 = vunpack.c.l.b16 %v74
    %v146 = vunpack.c.l.b16 %v75
    %v147 = vunpack.c.l.b16 %v76
    %v148 = vunpack.c.l.b16 %v77
    %v149 = vunpack.c.l.b16 %v78
    %v150 = vunpack.c.l.b16 %v79
    %v151 = vunpack.c.l.b16 %v80
    %v152 = vunpack.c.l.b16 %v81
    %v153 = vunpack.c.l.b16 %v82
    %v154 = vunpack.c.l.b16 %v83
    %v155 = vunpack.c.l.b16 %v84
    %v156 = vunpack.c.l.b16 %v85
    %v157 = vunpack.c.l.b16 %v86
    %v158 = vunpack.c.l.b16 %v87
    %v159 = vunpack.c.l.b16 %v88
    %v160 = vunpack.c.l.b16 %v89
    %v161 = vunpack.c.l.b16 %v90
    %v162 = vunpack.c.l.b16 %v91
    %v163 = vunpack.c.l.b16 %v92
    %v164 = vunpack.c.l.b16 %v93
    %v165 = vpack.c.b16 %v134, %v133
    %v166 = vpack.c.b16 %v136, %v135
    %v167 = vpack.c.b16 %v138, %v137
    %v168 = vpack.c.b16 %v140, %v139
    %v169 = vpack.c.b16 %v142, %v141
    %v170 = vpack.c.b16 %v144, %v143
    %v171 = vpack.c.b16 %v146, %v145
    %v172 = vpack.c.b16 %v148, %v147
    %v173 = vpack.c.b16 %v150, %v149
    %v174 = vpack.c.b16 %v152, %v151
    %v175 = vpack.c.b16 %v154, %v153
    %v176 = vpack.c.b16 %v156, %v155
    %v177 = vpack.c.b16 %v158, %v157
    %v178 = vpack.c.b16 %v160, %v159
    %v179 = vpack.c.b16 %v162, %v161
    %v180 = vpack.c.b16 %v164, %v163
    %197 = vmatprep.subr.bf16.mxu0 0
    %198 = vmatpush1.bf16.msra.mxu0 %v165
    %199 = vmatprep.subr.bf16.mxu0 0
    %200 = vmatpush1.bf16.msra.mxu0 %v166
    %201 = vmatprep.subr.bf16.mxu0 0
    %202 = vmatpush1.bf16.msra.mxu0 %v167
    %203 = vmatprep.subr.bf16.mxu0 0
    %204 = vmatpush1.bf16.msra.mxu0 %v168
    %205 = vmatprep.subr.bf16.mxu0 0
    %206 = vmatpush1.bf16.msra.mxu0 %v169
    %207 = vmatprep.subr.bf16.mxu0 0
    %208 = vmatpush1.bf16.msra.mxu0 %v170
    %209 = vmatprep.subr.bf16.mxu0 0
    %210 = vmatpush1.bf16.msra.mxu0 %v171
    %211 = vmatprep.subr.bf16.mxu0 0
    %212 = vmatpush1.bf16.msra.mxu0 %v172
    %213 = vmatprep.subr.bf16.mxu0 0
    %214 = vmatpush1.bf16.msra.mxu0 %v173
    %215 = vmatprep.subr.bf16.mxu0 0
    %216 = vmatpush1.bf16.msra.mxu0 %v174
    %217 = vmatprep.subr.bf16.mxu0 0
    %218 = vmatpush1.bf16.msra.mxu0 %v175
    %219 = vmatprep.subr.bf16.mxu0 0
    %220 = vmatpush1.bf16.msra.mxu0 %v176
    %221 = vmatprep.subr.bf16.mxu0 0
    %222 = vmatpush1.bf16.msra.mxu0 %v177
    %223 = vmatprep.subr.bf16.mxu0 0
    %224 = vmatpush1.bf16.msra.mxu0 %v178
    %225 = vmatprep.subr.bf16.mxu0 0
    %226 = vmatpush1.bf16.msra.mxu0 %v179
    %227 = vmatprep.subr.bf16.mxu0 0
    %228 = vmatpush1.bf16.msra.mxu0 %v180
    %229 = vmatprep.mubr.bf16.mxu0 %v61
    %230 = vmatmul.mubr.bf16.gmra.mrb[0].mxu0 %v60
    %v231 = vpop.f32.mrb[0].mxu0
    %v232 = vadd.f32 %v99, %v231
    %v233 = vpop.f32.mrb[0].mxu0
    %v234 = vpop.f32.mrb[0].mxu0
    %v235 = vpop.f32.mrb[0].mxu0
    %236 = vdwg.mxu0
    %v237 = vmax.f32 %v232, 0.0
    %v238 = vpack.c.bf16 %v237, %v237
    %v239 = vld [vmem:[#allocation7] sm:$0xff]
    %v240 = vld [vmem:[#allocation7 + $0x8] sm:$0xff]
    %v241 = vld [vmem:[#allocation7 + $0x10] sm:$0xff]
    %v242 = vld [vmem:[#allocation7 + $0x18] sm:$0xff]
    %v243 = vld [vmem:[#allocation7 + $0x20] sm:$0xff]
    %v244 = vld [vmem:[#allocation7 + $0x28] sm:$0xff]
    %v245 = vld [vmem:[#allocation7 + $0x30] sm:$0xff]
    %v246 = vld [vmem:[#allocation7 + $0x38] sm:$0xff]
    %v247 = vld [vmem:[#allocation7 + $0x40] sm:$0xff]
    %v248 = vld [vmem:[#allocation7 + $0x48] sm:$0xff]
    %v249 = vld [vmem:[#allocation7 + $0x50] sm:$0xff]
    %v250 = vld [vmem:[#allocation7 + $0x58] sm:$0xff]
    %v251 = vld [vmem:[#allocation7 + $0x60] sm:$0xff]
    %v252 = vld [vmem:[#allocation7 + $0x68] sm:$0xff]
    %v253 = vld [vmem:[#allocation7 + $0x70] sm:$0xff]
    %v254 = vld [vmem:[#allocation7 + $0x78] sm:$0xff]
    %v255 = vld [vmem:[%s3 + $0x1] sm:$0x3]
    %v257 = vlaneseq
    %v258 = vshrl.u32 %v257, 7
    %v259 = vsub.s32 0, %v258
    %v260 = vrot.slane %v255, %v259
    %v261 = vlaneseq
    %v262 = vshrl.u32 %v261, 7
    %v263 = vsub.s32 1, %v262
    %v264 = vrot.slane %v255, %v263
    %v283 = vunpack.c.l.b16 %v239
    %v284 = vunpack.c.h.b16 %v239
    %v285 = vunpack.c.l.b16 %v240
    %v286 = vunpack.c.h.b16 %v240
    %v287 = vunpack.c.l.b16 %v241
    %v288 = vunpack.c.h.b16 %v241
    %v289 = vunpack.c.l.b16 %v242
    %v290 = vunpack.c.h.b16 %v242
    %v291 = vunpack.c.l.b16 %v243
    %v292 = vunpack.c.h.b16 %v243
    %v293 = vunpack.c.l.b16 %v244
    %v294 = vunpack.c.h.b16 %v244
    %v295 = vunpack.c.l.b16 %v245
    %v296 = vunpack.c.h.b16 %v245
    %v297 = vunpack.c.l.b16 %v246
    %v298 = vunpack.c.h.b16 %v246
    %v299 = vunpack.c.l.b16 %v247
    %v300 = vunpack.c.h.b16 %v247
    %v301 = vunpack.c.l.b16 %v248
    %v302 = vunpack.c.h.b16 %v248
    %v303 = vunpack.c.l.b16 %v249
    %v304 = vunpack.c.h.b16 %v249
    %v305 = vunpack.c.l.b16 %v250
    %v306 = vunpack.c.h.b16 %v250
    %v307 = vunpack.c.l.b16 %v251
    %v308 = vunpack.c.h.b16 %v251
    %v309 = vunpack.c.l.b16 %v252
    %v310 = vunpack.c.h.b16 %v252
    %v311 = vunpack.c.l.b16 %v253
    %v312 = vunpack.c.h.b16 %v253
    %v313 = vunpack.c.l.b16 %v254
    %v314 = vunpack.c.h.b16 %v254
    %v315 = vpack.c.b16 %v285, %v283
    %v316 = vpack.c.b16 %v286, %v284
    %v317 = vpack.c.b16 %v289, %v287
    %v318 = vpack.c.b16 %v290, %v288
    %v319 = vpack.c.b16 %v293, %v291
    %v320 = vpack.c.b16 %v294, %v292
    %v321 = vpack.c.b16 %v297, %v295
    %v322 = vpack.c.b16 %v298, %v296
    %v323 = vpack.c.b16 %v301, %v299
    %v324 = vpack.c.b16 %v302, %v300
    %v325 = vpack.c.b16 %v305, %v303
    %v326 = vpack.c.b16 %v306, %v304
    %v327 = vpack.c.b16 %v309, %v307
    %v328 = vpack.c.b16 %v310, %v308
    %v329 = vpack.c.b16 %v313, %v311
    %v330 = vpack.c.b16 %v314, %v312
    %347 = vmatprep.subr.bf16.mxu0 %v316
    %348 = vmatpush1.bf16.msra.mxu0 %v315
    %349 = vmatprep.subr.bf16.mxu0 %v318
    %350 = vmatpush1.bf16.msra.mxu0 %v317
    %351 = vmatprep.subr.bf16.mxu0 %v320
    %352 = vmatpush1.bf16.msra.mxu0 %v319
    %353 = vmatprep.subr.bf16.mxu0 %v322
    %354 = vmatpush1.bf16.msra.mxu0 %v321
    %355 = vmatprep.subr.bf16.mxu0 %v324
    %356 = vmatpush1.bf16.msra.mxu0 %v323
    %357 = vmatprep.subr.bf16.mxu0 %v326
    %358 = vmatpush1.bf16.msra.mxu0 %v325
    %359 = vmatprep.subr.bf16.mxu0 %v328
    %360 = vmatpush1.bf16.msra.mxu0 %v327
    %361 = vmatprep.subr.bf16.mxu0 %v330
    %362 = vmatpush1.bf16.msra.mxu0 %v329
    %363 = vmatprep.subr.bf16.mxu0 0
    %364 = vmatpush1.bf16.msra.mxu0 0
    %365 = vmatprep.subr.bf16.mxu0 0
    %366 = vmatpush1.bf16.msra.mxu0 0
    %367 = vmatprep.subr.bf16.mxu0 0
    %368 = vmatpush1.bf16.msra.mxu0 0
    %369 = vmatprep.subr.bf16.mxu0 0
    %370 = vmatpush1.bf16.msra.mxu0 0
    %371 = vmatprep.subr.bf16.mxu0 0
    %372 = vmatpush1.bf16.msra.mxu0 0
    %373 = vmatprep.subr.bf16.mxu0 0
    %374 = vmatpush1.bf16.msra.mxu0 0
    %375 = vmatprep.subr.bf16.mxu0 0
    %376 = vmatpush1.bf16.msra.mxu0 0
    %377 = vmatprep.subr.bf16.mxu0 0
    %378 = vmatpush1.bf16.msra.mxu0 0
    %379 = vmatprep.mubr.bf16.mxu0 0
    %380 = vmatmul.mubr.bf16.gmra.mrb[0].mxu0 %v238
    %v381 = vpop.f32.mrb[0].mxu0
    %v382 = vadd.f32 %v260, %v381
    %v383 = vpop.f32.mrb[0].mxu0
    %v384 = vadd.f32 %v264, %v383
    %v385 = vpop.f32.mrb[0].mxu0
    %v386 = vpop.f32.mrb[0].mxu0
    %387 = vdwg.mxu0
    %388 = vst [vmem:[#allocation8] sm:$0xff] %v382
    %389 = vst [vmem:[#allocation8 + $0x8] sm:$0xff] %v384
    // Predicated region
    $region30: #{tpu_custom_call.1} parent=1 // pred_check
      _
    $region31: #{tpu_custom_call.1} parent=1 // pred_check_branch
      %391 = sbr.rel (0) target = $region33
    $region32: #{tpu_custom_call.1} parent=1 // pred_region
      %s393 = ssub.s32 256, 256
      %394 = vsyncadd [#allocation4], %s393
      %s396 = sshll.u32 [#allocation8], 4
      %s397 = int_to_ptr.vmem [resolvable:$true] %s396
      %399 = dma.vmem_to_hbm [thread:$0]  %s397, 256, %s4, [#allocation4]
    $region33: #{tpu_custom_call.1} parent=1 // pred_fallthru
      _
    // Predicated region
    $region34: #{tpu_custom_call.1} parent=1 // pred_check
      _
    $region35: #{tpu_custom_call.1} parent=1 // pred_check_branch
      %401 = sbr.rel (0) target = $region37
    $region36: #{tpu_custom_call.1} parent=1 // pred_region
      %402 = dma.done [#allocation4], 256
    $region37: #{tpu_custom_call.1} parent=1 // pred_fallthru
      _
    %403 = vsyncpa [#allocation3], 1
    %404 = vsyncpa [#allocation6], 1
    %405 = vsyncpa [#allocation4], 1

// kernel: tpu_custom_call.1
$region0: #{tpu_custom_call.1}
  #allocation0 [shape = 'u32[]', space=smem, size = 0x4, offset = 0x4, fixed_abs, tag = 'smem constant byte address 0x4 - core index']
  #allocation1 [shape = 'u32[144,128]{1,0:T(1,128)}', space=vmem, size = 0x12000, scoped, tag = 'internal scratch']
  %s0 = inlined_call_operand.hbm [shape: f32[8,256], index: 0, kind: input, shape index: {}]
  %s1 = inlined_call_operand.hbm [shape: bf16[256,128], index: 1, kind: input, shape index: {}]
  %s2 = inlined_call_operand.hbm [shape: bf16[128,256], index: 2, kind: input, shape index: {}]
  %s3 = inlined_call_operand.vmem [shape: f32[1,384], index: 3, kind: input, shape index: {}]
  %s4 = inlined_call_operand.hbm [shape: f32[8,256], index: 4, kind: output, shape index: {}]
  %s5 = sld [smem:[#allocation0]]
  $region38: #{tpu_custom_call.1} parent=0
    _
  %s7 = ssub.s32 1, %s5
  %s8 = scalar_select 0, %s7, %s5
  $region1: #{tpu_custom_call.1} parent=0
    #allocation2 [shape = 'u8[8192]{0}', space=vmem, size = 0x2000, scoped, tag = 'input window, operand 0, single buffered']
    #allocation3 [shape = 's32[1]{0}', space=sflag, size = 0x4, scoped, tag = 'scoped memory for tpu_custom_call.1']
    #allocation4 [shape = 's32[1]{0}', space=sflag, size = 0x4, scoped, tag = 'scoped memory for tpu_custom_call.1']
    #allocation5 [shape = 'u8[65536]{0}', space=vmem, size = 0x10000, scoped, tag = 'input window, operand 1, single buffered']
    #allocation6 [shape = 's32[1]{0}', space=sflag, size = 0x4, scoped, tag = 'scoped memory for tpu_custom_call.1']
    #allocation7 [shape = 'u8[65536]{0}', space=vmem, size = 0x10000, scoped, tag = 'input window, operand 2, single buffered']
    #allocation8 [shape = 'u8[8192]{0}', space=vmem, size = 0x2000, scoped, tag = 'output window, operand 0, single buffered']
    %9 = vsyncpa [#allocation3], 0
    %10 = vsyncpa [#allocation6], 0
    %11 = vsyncpa [#allocation4], 0
    // Predicated region
    $region2: #{tpu_custom_call.1} parent=1 // pred_check
      _
    $region3: #{tpu_custom_call.1} parent=1 // pred_check_branch
      %13 = sbr.rel (0) target = $region5
    $region4: #{tpu_custom_call.1} parent=1 // pred_region
      %s15 = ssub.s32 256, 256
      %16 = vsyncadd [#allocation3], %s15
      %s18 = sshll.u32 [#allocation2], 4
      %s19 = int_to_ptr.vmem [resolvable:$true] %s18
      %21 = dma.hbm_to_vmem [thread:$0]  %s0, 256, %s19, [#allocation3]
    $region5: #{tpu_custom_call.1} parent=1 // pred_fallthru
      _
    // Predicated region
    $region6: #{tpu_custom_call.1} parent=1 // pred_check
      _
    $region7: #{tpu_custom_call.1} parent=1 // pred_check_branch
      %23 = sbr.rel (0) target = $region9
    $region8: #{tpu_custom_call.1} parent=1 // pred_region
      %s25 = ssub.s32 2048, 2048
      %26 = vsyncadd [#allocation6], %s25
      %s27 = sshll.u32 [#allocation5], 4
      %s28 = int_to_ptr.vmem [resolvable:$true] %s27
      %33 = dma.hbm_to_vmem [thread:$0]  %s1, 2048, %s28, [#allocation6], 64, 64, 4
    $region9: #{tpu_custom_call.1} parent=1 // pred_fallthru
      _
    // Predicated region
    $region10: #{tpu_custom_call.1} parent=1 // pred_check
      _
    $region11: #{tpu_custom_call.1} parent=1 // pred_check_branch
      %35 = sbr.rel (0) target = $region13
    $region12: #{tpu_custom_call.1} parent=1 // pred_region
      %s37 = ssub.s32 2048, 2048
      %38 = vsyncadd [#allocation6], %s37
      %s39 = sshll.u32 [#allocation7], 4
      %s40 = int_to_ptr.vmem [resolvable:$true] %s39
      %45 = dma.hbm_to_vmem [thread:$0]  %s2, 2048, %s40, [#allocation6], 128, 128, 8
    $region13: #{tpu_custom_call.1} parent=1 // pred_fallthru
      _
    // Predicated region
    $region14: #{tpu_custom_call.1} parent=1 // pred_check
      _
    $region15: #{tpu_custom_call.1} parent=1 // pred_check_branch
      %47 = sbr.rel (0) target = $region17
    $region16: #{tpu_custom_call.1} parent=1 // pred_region
      _
    $region17: #{tpu_custom_call.1} parent=1 // pred_fallthru
      _
    // Predicated region
    $region18: #{tpu_custom_call.1} parent=1 // pred_check
      _
    $region19: #{tpu_custom_call.1} parent=1 // pred_check_branch
      %49 = sbr.rel (0) target = $region21
    $region20: #{tpu_custom_call.1} parent=1 // pred_region
      %50 = dma.done [#allocation3], 256
    $region21: #{tpu_custom_call.1} parent=1 // pred_fallthru
      _
    // Predicated region
    $region22: #{tpu_custom_call.1} parent=1 // pred_check
      _
    $region23: #{tpu_custom_call.1} parent=1 // pred_check_branch
      %52 = sbr.rel (0) target = $region25
    $region24: #{tpu_custom_call.1} parent=1 // pred_region
      %53 = dma.done [#allocation6], 2048
    $region25: #{tpu_custom_call.1} parent=1 // pred_fallthru
      _
    // Predicated region
    $region26: #{tpu_custom_call.1} parent=1 // pred_check
      _
    $region27: #{tpu_custom_call.1} parent=1 // pred_check_branch
      %55 = sbr.rel (0) target = $region29
    $region28: #{tpu_custom_call.1} parent=1 // pred_region
      %56 = dma.done [#allocation6], 2048
    $region29: #{tpu_custom_call.1} parent=1 // pred_fallthru
      _
    %v58 = vld [vmem:[#allocation2] sm:$0xff]
    %v59 = vld [vmem:[#allocation2 + $0x8] sm:$0xff]
    %v60 = vpack.c.bf16 %v58, %v58
    %v61 = vpack.c.bf16 %v59, %v59
    %v62 = vld [vmem:[#allocation5] sm:$0xf]
    %v63 = vld [vmem:[#allocation5 + $0x4] sm:$0xf]
    %v64 = vld [vmem:[#allocation5 + $0x8] sm:$0xf]
    %v65 = vld [vmem:[#allocation5 + $0xc] sm:$0xf]
    %v66 = vld [vmem:[#allocation5 + $0x10] sm:$0xf]
    %v67 = vld [vmem:[#allocation5 + $0x14] sm:$0xf]
    %v68 = vld [vmem:[#allocation5 + $0x18] sm:$0xf]
    %v69 = vld [vmem:[#allocation5 + $0x1c] sm:$0xf]
    %v70 = vld [vmem:[#allocation5 + $0x20] sm:$0xf]
    %v71 = vld [vmem:[#allocation5 + $0x24] sm:$0xf]
    %v72 = vld [vmem:[#allocation5 + $0x28] sm:$0xf]
    %v73 = vld [vmem:[#allocation5 + $0x2c] sm:$0xf]
    %v74 = vld [vmem:[#allocation5 + $0x30] sm:$0xf]
    %v75 = vld [vmem:[#allocation5 + $0x34] sm:$0xf]
    %v76 = vld [vmem:[#allocation5 + $0x38] sm:$0xf]
    %v77 = vld [vmem:[#allocation5 + $0x3c] sm:$0xf]
    %v78 = vld [vmem:[#allocation5 + $0x40] sm:$0xf]
    %v79 = vld [vmem:[#allocation5 + $0x44] sm:$0xf]
    %v80 = vld [vmem:[#allocation5 + $0x48] sm:$0xf]
    %v81 = vld [vmem:[#allocation5 + $0x4c] sm:$0xf]
    %v82 = vld [vmem:[#allocation5 + $0x50] sm:$0xf]
    %v83 = vld [vmem:[#allocation5 + $0x54] sm:$0xf]
    %v84 = vld [vmem:[#allocation5 + $0x58] sm:$0xf]
    %v85 = vld [vmem:[#allocation5 + $0x5c] sm:$0xf]
    %v86 = vld [vmem:[#allocation5 + $0x60] sm:$0xf]
    %v87 = vld [vmem:[#allocation5 + $0x64] sm:$0xf]
    %v88 = vld [vmem:[#allocation5 + $0x68] sm:$0xf]
    %v89 = vld [vmem:[#allocation5 + $0x6c] sm:$0xf]
    %v90 = vld [vmem:[#allocation5 + $0x70] sm:$0xf]
    %v91 = vld [vmem:[#allocation5 + $0x74] sm:$0xf]
    %v92 = vld [vmem:[#allocation5 + $0x78] sm:$0xf]
    %v93 = vld [vmem:[#allocation5 + $0x7c] sm:$0xf]
    %v94 = vld [vmem:[%s3] sm:$0x1]
    %v96 = vlaneseq
    %v97 = vshrl.u32 %v96, 7
    %v98 = vsub.s32 0, %v97
    %v99 = vrot.slane %v94, %v98
    %v133 = vunpack.c.l.b16 %v62
    %v134 = vunpack.c.l.b16 %v63
    %v135 = vunpack.c.l.b16 %v64
    %v136 = vunpack.c.l.b16 %v65
    %v137 = vunpack.c.l.b16 %v66
    %v138 = vunpack.c.l.b16 %v67
    %v139 = vunpack.c.l.b16 %v68
    %v140 = vunpack.c.l.b16 %v69
    %v141 = vunpack.c.l.b16 %v70
    %v142 = vunpack.c.l.b16 %v71
    %v143 = vunpack.c.l.b16 %v72
    %v144 = vunpack.c.l.b16 %v73
    %v145 = vunpack.c.l.b16 %v74
    %v146 = vunpack.c.l.b16 %v75
    %v147 = vunpack.c.l.b16 %v76
    %v148 = vunpack.c.l.b16 %v77
    %v149 = vunpack.c.l.b16 %v78
    %v150 = vunpack.c.l.b16 %v79
    %v151 = vunpack.c.l.b16 %v80
    %v152 = vunpack.c.l.b16 %v81
    %v153 = vunpack.c.l.b16 %v82
    %v154 = vunpack.c.l.b16 %v83
    %v155 = vunpack.c.l.b16 %v84
    %v156 = vunpack.c.l.b16 %v85
    %v157 = vunpack.c.l.b16 %v86
    %v158 = vunpack.c.l.b16 %v87
    %v159 = vunpack.c.l.b16 %v88
    %v160 = vunpack.c.l.b16 %v89
    %v161 = vunpack.c.l.b16 %v90
    %v162 = vunpack.c.l.b16 %v91
    %v163 = vunpack.c.l.b16 %v92
    %v164 = vunpack.c.l.b16 %v93
    %v165 = vpack.c.b16 %v134, %v133
    %v166 = vpack.c.b16 %v136, %v135
    %v167 = vpack.c.b16 %v138, %v137
    %v168 = vpack.c.b16 %v140, %v139
    %v169 = vpack.c.b16 %v142, %v141
    %v170 = vpack.c.b16 %v144, %v143
    %v171 = vpack.c.b16 %v146, %v145
    %v172 = vpack.c.b16 %v148, %v147
    %v173 = vpack.c.b16 %v150, %v149
    %v174 = vpack.c.b16 %v152, %v151
    %v175 = vpack.c.b16 %v154, %v153
    %v176 = vpack.c.b16 %v156, %v155
    %v177 = vpack.c.b16 %v158, %v157
    %v178 = vpack.c.b16 %v160, %v159
    %v179 = vpack.c.b16 %v162, %v161
    %v180 = vpack.c.b16 %v164, %v163
    %197 = vmatprep.subr.bf16.mxu0 0
    %198 = vmatpush1.bf16.msra.mxu0 %v165
    %199 = vmatprep.subr.bf16.mxu0 0
    %200 = vmatpush1.bf16.msra.mxu0 %v166
    %201 = vmatprep.subr.bf16.mxu0 0
    %202 = vmatpush1.bf16.msra.mxu0 %v167
    %203 = vmatprep.subr.bf16.mxu0 0
    %204 = vmatpush1.bf16.msra.mxu0 %v168
    %205 = vmatprep.subr.bf16.mxu0 0
    %206 = vmatpush1.bf16.msra.mxu0 %v169
    %207 = vmatprep.subr.bf16.mxu0 0
    %208 = vmatpush1.bf16.msra.mxu0 %v170
    %209 = vmatprep.subr.bf16.mxu0 0
    %210 = vmatpush1.bf16.msra.mxu0 %v171
    %211 = vmatprep.subr.bf16.mxu0 0
    %212 = vmatpush1.bf16.msra.mxu0 %v172
    %213 = vmatprep.subr.bf16.mxu0 0
    %214 = vmatpush1.bf16.msra.mxu0 %v173
    %215 = vmatprep.subr.bf16.mxu0 0
    %216 = vmatpush1.bf16.msra.mxu0 %v174
    %217 = vmatprep.subr.bf16.mxu0 0
    %218 = vmatpush1.bf16.msra.mxu0 %v175
    %219 = vmatprep.subr.bf16.mxu0 0
    %220 = vmatpush1.bf16.msra.mxu0 %v176
    %221 = vmatprep.subr.bf16.mxu0 0
    %222 = vmatpush1.bf16.msra.mxu0 %v177
    %223 = vmatprep.subr.bf16.mxu0 0
    %224 = vmatpush1.bf16.msra.mxu0 %v178
    %225 = vmatprep.subr.bf16.mxu0 0
    %226 = vmatpush1.bf16.msra.mxu0 %v179
    %227 = vmatprep.subr.bf16.mxu0 0
    %228 = vmatpush1.bf16.msra.mxu0 %v180
    %229 = vmatprep.mubr.bf16.mxu0 %v61
    %230 = vmatmul.mubr.bf16.gmra.mrb[0].mxu0 %v60
    %v231 = vpop.f32.mrb[0].mxu0
    %v232 = vadd.f32 %v99, %v231
    %v233 = vpop.f32.mrb[0].mxu0
    %v234 = vpop.f32.mrb[0].mxu0
    %v235 = vpop.f32.mrb[0].mxu0
    %236 = vdwg.mxu0
    %v237 = vmax.f32 %v232, 0.0
    %v238 = vpack.c.bf16 %v237, %v237
    %v239 = vld [vmem:[#allocation7] sm:$0xff]
    %v240 = vld [vmem:[#allocation7 + $0x8] sm:$0xff]
    %v241 = vld [vmem:[#allocation7 + $0x10] sm:$0xff]
    %v242 = vld [vmem:[#allocation7 + $0x18] sm:$0xff]
    %v243 = vld [vmem:[#allocation7 + $0x20] sm:$0xff]
    %v244 = vld [vmem:[#allocation7 + $0x28] sm:$0xff]
    %v245 = vld [vmem:[#allocation7 + $0x30] sm:$0xff]
    %v246 = vld [vmem:[#allocation7 + $0x38] sm:$0xff]
    %v247 = vld [vmem:[#allocation7 + $0x40] sm:$0xff]
    %v248 = vld [vmem:[#allocation7 + $0x48] sm:$0xff]
    %v249 = vld [vmem:[#allocation7 + $0x50] sm:$0xff]
    %v250 = vld [vmem:[#allocation7 + $0x58] sm:$0xff]
    %v251 = vld [vmem:[#allocation7 + $0x60] sm:$0xff]
    %v252 = vld [vmem:[#allocation7 + $0x68] sm:$0xff]
    %v253 = vld [vmem:[#allocation7 + $0x70] sm:$0xff]
    %v254 = vld [vmem:[#allocation7 + $0x78] sm:$0xff]
    %v255 = vld [vmem:[%s3 + $0x1] sm:$0x3]
    %v257 = vlaneseq
    %v258 = vshrl.u32 %v257, 7
    %v259 = vsub.s32 0, %v258
    %v260 = vrot.slane %v255, %v259
    %v261 = vlaneseq
    %v262 = vshrl.u32 %v261, 7
    %v263 = vsub.s32 1, %v262
    %v264 = vrot.slane %v255, %v263
    %v283 = vunpack.c.l.b16 %v239
    %v284 = vunpack.c.h.b16 %v239
    %v285 = vunpack.c.l.b16 %v240
    %v286 = vunpack.c.h.b16 %v240
    %v287 = vunpack.c.l.b16 %v241
    %v288 = vunpack.c.h.b16 %v241
    %v289 = vunpack.c.l.b16 %v242
    %v290 = vunpack.c.h.b16 %v242
    %v291 = vunpack.c.l.b16 %v243
    %v292 = vunpack.c.h.b16 %v243
    %v293 = vunpack.c.l.b16 %v244
    %v294 = vunpack.c.h.b16 %v244
    %v295 = vunpack.c.l.b16 %v245
    %v296 = vunpack.c.h.b16 %v245
    %v297 = vunpack.c.l.b16 %v246
    %v298 = vunpack.c.h.b16 %v246
    %v299 = vunpack.c.l.b16 %v247
    %v300 = vunpack.c.h.b16 %v247
    %v301 = vunpack.c.l.b16 %v248
    %v302 = vunpack.c.h.b16 %v248
    %v303 = vunpack.c.l.b16 %v249
    %v304 = vunpack.c.h.b16 %v249
    %v305 = vunpack.c.l.b16 %v250
    %v306 = vunpack.c.h.b16 %v250
    %v307 = vunpack.c.l.b16 %v251
    %v308 = vunpack.c.h.b16 %v251
    %v309 = vunpack.c.l.b16 %v252
    %v310 = vunpack.c.h.b16 %v252
    %v311 = vunpack.c.l.b16 %v253
    %v312 = vunpack.c.h.b16 %v253
    %v313 = vunpack.c.l.b16 %v254
    %v314 = vunpack.c.h.b16 %v254
    %v315 = vpack.c.b16 %v285, %v283
    %v316 = vpack.c.b16 %v286, %v284
    %v317 = vpack.c.b16 %v289, %v287
    %v318 = vpack.c.b16 %v290, %v288
    %v319 = vpack.c.b16 %v293, %v291
    %v320 = vpack.c.b16 %v294, %v292
    %v321 = vpack.c.b16 %v297, %v295
    %v322 = vpack.c.b16 %v298, %v296
    %v323 = vpack.c.b16 %v301, %v299
    %v324 = vpack.c.b16 %v302, %v300
    %v325 = vpack.c.b16 %v305, %v303
    %v326 = vpack.c.b16 %v306, %v304
    %v327 = vpack.c.b16 %v309, %v307
    %v328 = vpack.c.b16 %v310, %v308
    %v329 = vpack.c.b16 %v313, %v311
    %v330 = vpack.c.b16 %v314, %v312
    %347 = vmatprep.subr.bf16.mxu0 %v316
    %348 = vmatpush1.bf16.msra.mxu0 %v315
    %349 = vmatprep.subr.bf16.mxu0 %v318
    %350 = vmatpush1.bf16.msra.mxu0 %v317
    %351 = vmatprep.subr.bf16.mxu0 %v320
    %352 = vmatpush1.bf16.msra.mxu0 %v319
    %353 = vmatprep.subr.bf16.mxu0 %v322
    %354 = vmatpush1.bf16.msra.mxu0 %v321
    %355 = vmatprep.subr.bf16.mxu0 %v324
    %356 = vmatpush1.bf16.msra.mxu0 %v323
    %357 = vmatprep.subr.bf16.mxu0 %v326
    %358 = vmatpush1.bf16.msra.mxu0 %v325
    %359 = vmatprep.subr.bf16.mxu0 %v328
    %360 = vmatpush1.bf16.msra.mxu0 %v327
    %361 = vmatprep.subr.bf16.mxu0 %v330
    %362 = vmatpush1.bf16.msra.mxu0 %v329
    %363 = vmatprep.subr.bf16.mxu0 0
    %364 = vmatpush1.bf16.msra.mxu0 0
    %365 = vmatprep.subr.bf16.mxu0 0
    %366 = vmatpush1.bf16.msra.mxu0 0
    %367 = vmatprep.subr.bf16.mxu0 0
    %368 = vmatpush1.bf16.msra.mxu0 0
    %369 = vmatprep.subr.bf16.mxu0 0
    %370 = vmatpush1.bf16.msra.mxu0 0
    %371 = vmatprep.subr.bf16.mxu0 0
    %372 = vmatpush1.bf16.msra.mxu0 0
    %373 = vmatprep.subr.bf16.mxu0 0
    %374 = vmatpush1.bf16.msra.mxu0 0
    %375 = vmatprep.subr.bf16.mxu0 0
    %376 = vmatpush1.bf16.msra.mxu0 0
    %377 = vmatprep.subr.bf16.mxu0 0
    %378 = vmatpush1.bf16.msra.mxu0 0
    %379 = vmatprep.mubr.bf16.mxu0 0
    %380 = vmatmul.mubr.bf16.gmra.mrb[0].mxu0 %v238
    %v381 = vpop.f32.mrb[0].mxu0
    %v382 = vadd.f32 %v260, %v381
    %v383 = vpop.f32.mrb[0].mxu0
    %v384 = vadd.f32 %v264, %v383
    %v385 = vpop.f32.mrb[0].mxu0
    %v386 = vpop.f32.mrb[0].mxu0
    %387 = vdwg.mxu0
    %388 = vst [vmem:[#allocation8] sm:$0xff] %v382
    %389 = vst [vmem:[#allocation8 + $0x8] sm:$0xff] %v384
    // Predicated region
    $region30: #{tpu_custom_call.1} parent=1 // pred_check
      _
    $region31: #{tpu_custom_call.1} parent=1 // pred_check_branch
      %391 = sbr.rel (0) target = $region33
    $region32: #{tpu_custom_call.1} parent=1 // pred_region
      %s393 = ssub.s32 256, 256
      %394 = vsyncadd [#allocation4], %s393
      %s396 = sshll.u32 [#allocation8], 4
      %s397 = int_to_ptr.vmem [resolvable:$true] %s396
      %399 = dma.vmem_to_hbm [thread:$0]  %s397, 256, %s4, [#allocation4]
    $region33: #{tpu_custom_call.1} parent=1 // pred_fallthru
      _
    // Predicated region
    $region34: #{tpu_custom_call.1} parent=1 // pred_check
      _
    $region35: #{tpu_custom_call.1} parent=1 // pred_check_branch
      %401 = sbr.rel (0) target = $region37
    $region36: #{tpu_custom_call.1} parent=1 // pred_region
      %402 = dma.done [#allocation4], 256
    $region37: #{tpu_custom_call.1} parent=1 // pred_fallthru
      _
    %403 = vsyncpa [#allocation3], 1
    %404 = vsyncpa [#allocation6], 1
    %405 = vsyncpa [#allocation4], 1

</llo_original>
